<compile_context>
chip_gen: v5e
topology: v5e:2x2
jax: 0.10.0
libtpu: 0.0.40
codegen_flags: <defaults>
</compile_context>

<pallas_src>
import math
from functools import partial

import jax
import jax.numpy as jnp
from jax.experimental import pallas as pl
from jax.experimental.pallas import tpu as pltpu


# -----------------------------------------------------------------------------
# Irreps description: list of (mul, l, parity)
# -----------------------------------------------------------------------------
IRREPS_IN = [(8, 0, 1), (8, 1, -1)]    # "8x0e + 8x1o"  -> dim 8 + 8*3 = 32
IRREPS_OUT = [(16, 0, 1), (8, 1, -1)]  # "16x0e + 8x1o" -> dim 16 + 8*3 = 40


def irreps_dim(irreps):
    return sum(mul * (2 * l + 1) for mul, l, _ in irreps)


def irreps_slices(irreps):
    """Start/stop offsets of each irrep block in the flat feature vector."""
    slices, off = [], 0
    for mul, l, _ in irreps:
        d = mul * (2 * l + 1)
        slices.append((off, off + d))
        off += d
    return slices


# -----------------------------------------------------------------------------
# Parameter construction (deterministic, e3nn-style randn init)
# -----------------------------------------------------------------------------
def make_linear_weights(key, irreps_in, irreps_out):
    """Per-path weights W[(i_in, i_out)] of shape (mul_in, mul_out), randn init."""
    weights = {}
    for i_out, (mul_out, l_out, p_out) in enumerate(irreps_out):
        for i_in, (mul_in, l_in, p_in) in enumerate(irreps_in):
            if l_in == l_out and p_in == p_out:
                key, sub = jax.random.split(key)
                weights[(i_in, i_out)] = jax.random.normal(
                    sub, (mul_in, mul_out), dtype=jnp.float32
                )
    return weights


def build_dense_weight_t(weights, irreps_in, irreps_out):
    """Assemble W_big^T of shape (dout, din): blocks pw * kron(W, I_{2l+1})."""
    din, dout = irreps_dim(irreps_in), irreps_dim(irreps_out)
    sl_in, sl_out = irreps_slices(irreps_in), irreps_slices(irreps_out)
    w_big = jnp.zeros((din, dout), dtype=jnp.float32)

    # fan_in per output irrep (path_normalization="element", default)
    fan_in = {}
    for (i_in, i_out) in weights:
        fan_in[i_out] = fan_in.get(i_out, 0) + irreps_in[i_in][0]

    for (i_in, i_out), w in weights.items():
        _, l, _ = irreps_in[i_in]
        d = 2 * l + 1
        path_weight = 1.0 / math.sqrt(fan_in[i_out])
        block = path_weight * jnp.kron(w, jnp.eye(d, dtype=jnp.float32))
        r0, r1 = sl_in[i_in]
        c0, c1 = sl_out[i_out]
        w_big = w_big.at[r0:r1, c0:c1].set(block)

    # NOTE: for realistic irreps (hundreds of channels, l up to 2-3), replace
    # the kron-padded dense W_big with per-l weight matrices / per-l matmuls
    # inside the same grid step to avoid structural zeros; neutral at this toy
    # 32x40 size, so kept dense here.
    return w_big.T  # (dout, din)


# -----------------------------------------------------------------------------
# Pallas kernel: y^T = W_big^T @ x^T, nodes in the lane dimension
# -----------------------------------------------------------------------------
def _linear_kernel(wt_ref, xt_ref, ot_ref):
    # wt: (dout, din) resident tile; xt: (din, tile_n); ot: (dout, tile_n)
    ot_ref[...] = jnp.dot(
        wt_ref[...], xt_ref[...], preferred_element_type=jnp.float32
    ).astype(ot_ref.dtype)


def _round_up(a, b):
    return ((a + b - 1) // b) * b


@partial(jax.jit, static_argnames=("tile_n", "use_bf16"))
def irreps_linear_pallas_cm(x_cm, w_big_t, tile_n=8192, use_bf16=False):
    """Channel-major path: x_cm (din, N) -> (dout, N). No layout plumbing."""
    din, n = x_cm.shape
    dout = w_big_t.shape[0]

    if use_bf16:
        # bf16 storage (half the HBM bytes), f32 accumulation on the MXU.
        x_cm = x_cm.astype(jnp.bfloat16)
        w_big_t = w_big_t.astype(jnp.bfloat16)

    # Lane tile: multiple of 128, large (default 8192 nodes) to amortize the
    # ~0.35 us per-grid-step overhead; clamped so small graphs don't allocate
    # an oversized VMEM block.
    tile = max(128, (tile_n // 128) * 128)
    tile = min(tile, _round_up(n, 128))

    # If there would be a single grid step yet it moves a lot of data
    # (>= ~4 MiB), split into two steps so v7x's two TensorCores both get
    # work.  For small graphs (e.g. N=1000 -> ~72 KiB) we deliberately keep
    # one step: splitting gains nothing on 1-TC v5e/v6e and only adds a second
    # grid-step's overhead.
    node_bytes = din * x_cm.dtype.itemsize + dout * 4  # out stays f32
    if n <= tile and n * node_bytes >= (4 << 20):
        tile = max(128, _round_up(pl.cdiv(n, 2), 128))

    grid = (pl.cdiv(n, tile),)

    yt = pl.pallas_call(
        _linear_kernel,
        out_shape=jax.ShapeDtypeStruct((dout, n), jnp.float32),
        grid_spec=pltpu.PrefetchScalarGridSpec(
            num_scalar_prefetch=0,
            grid=grid,
            in_specs=[
                # W^T stays resident (constant block index -> no re-DMA).
                pl.BlockSpec((dout, din), lambda i: (0, 0)),
                # Node tile: lane-dense, zero sublane padding (din = 32).
                pl.BlockSpec((din, tile), lambda i: (0, i)),
            ],
            # Output tile: lane-dense stores (dout = 40 sublanes). The partial
            # last block (if N % tile != 0) is masked by Pallas; the matmul is
            # column-independent so junk lanes never contaminate valid ones.
            out_specs=pl.BlockSpec((dout, tile), lambda i: (0, i)),
        ),
        compiler_params=pltpu.CompilerParams(
            dimension_semantics=("parallel",),
            # Safe under v7x's 64 MiB physical VMEM, roomy on v5e/v6e (128 MiB),
            # and comfortably holds double-buffered 16K-node tiles.
            vmem_limit_bytes=48 * 1024 * 1024,
        ),
    )(w_big_t, x_cm)

    return yt  # (dout, N)


@partial(jax.jit, static_argnames=("tile_n", "use_bf16"))
def irreps_linear_pallas(x, w_big_t, tile_n=8192, use_bf16=False):
    """Node-major compatibility path: x (N, din) -> (N, dout).

    Only the two boundary transposes remain (no jnp.pad). In a full model,
    keep features channel-major end-to-end and call irreps_linear_pallas_cm
    directly so even these disappear.
    """
    yt = irreps_linear_pallas_cm(x.T, w_big_t, tile_n=tile_n, use_bf16=use_bf16)
    return yt.T


# -----------------------------------------------------------------------------
# Pure-JAX reference (direct e3nn-style per-irrep einsum)
# -----------------------------------------------------------------------------
def irreps_linear_ref(x, weights, irreps_in, irreps_out):
    n = x.shape[0]
    sl_in = irreps_slices(irreps_in)

    fan_in = {}
    for (i_in, i_out) in weights:
        fan_in[i_out] = fan_in.get(i_out, 0) + irreps_in[i_in][0]

    out_blocks = []
    for i_out, (mul_out, l, _) in enumerate(irreps_out):
        d = 2 * l + 1
        acc = jnp.zeros((n, mul_out, d), dtype=jnp.float32)
        for (i_in, j_out), w in weights.items():
            if j_out != i_out:
                continue
            mul_in = irreps_in[i_in][0]
            r0, r1 = sl_in[i_in]
            x_blk = x[:, r0:r1].reshape(n, mul_in, d)
            pw = 1.0 / math.sqrt(fan_in[i_out])
            acc = acc + pw * jnp.einsum("uw,num->nwm", w, x_blk)
        out_blocks.append(acc.reshape(n, mul_out * d))
    return jnp.concatenate(out_blocks, axis=-1)


# -----------------------------------------------------------------------------
# "Module" wrapper mimicking IrrepsLinear.forward on an AtomGraphData dict
# -----------------------------------------------------------------------------
class IrrepsLinearPallas:
    def __init__(self, irreps_in, irreps_out, data_key_in, data_key_out=None, *,
                 key, channel_major=False, tile_n=8192, use_bf16=False):
        self.key_input = data_key_in
        self.key_output = data_key_in if data_key_out is None else data_key_out
        self.irreps_in = irreps_in
        self.irreps_out = irreps_out
        self.channel_major = channel_major
        self.tile_n = tile_n
        self.use_bf16 = use_bf16
        self.weights = make_linear_weights(key, irreps_in, irreps_out)
        self.w_big_t = build_dense_weight_t(self.weights, irreps_in, irreps_out)

    def __call__(self, data):
        x = data[self.key_input]
        if self.channel_major:
            y = irreps_linear_pallas_cm(
                x, self.w_big_t, tile_n=self.tile_n, use_bf16=self.use_bf16)
        else:
            y = irreps_linear_pallas(
                x, self.w_big_t, tile_n=self.tile_n, use_bf16=self.use_bf16)
        data[self.key_output] = y
        return data


if __name__ == "__main__":
    rng = jax.random.PRNGKey(0)
    k_param, k_x = jax.random.split(rng)

    num_nodes = 1000                  # deliberately NOT a multiple of 128
    din = irreps_dim(IRREPS_IN)       # 32
    dout = irreps_dim(IRREPS_OUT)     # 40

    module = IrrepsLinearPallas(
        IRREPS_IN, IRREPS_OUT, data_key_in="node_feature",
        data_key_out="node_feature_out", key=k_param,
    )

    x = jax.random.normal(k_x, (num_nodes, din), dtype=jnp.float32)
    y_ref = irreps_linear_ref(x, module.weights, IRREPS_IN, IRREPS_OUT)

    # 1) Node-major compatibility path (matches the original module API).
    data = {"node_feature": x}
    data = module(data)
    y = jax.block_until_ready(data["node_feature_out"])
    assert y.shape == (num_nodes, dout)
    assert jnp.allclose(y, y_ref, atol=1e-5, rtol=1e-5)

    # 2) Channel-major path (no boundary transposes at all).
    y_cm = jax.block_until_ready(
        irreps_linear_pallas_cm(x.T, module.w_big_t))
    assert y_cm.shape == (dout, num_nodes)
    assert jnp.allclose(y_cm.T, y_ref, atol=1e-5, rtol=1e-5)

    # 3) Optional bf16 storage path (different numerics -> looser tolerance).
    y_bf16 = jax.block_until_ready(
        irreps_linear_pallas_cm(x.T, module.w_big_t, use_bf16=True))
    assert jnp.allclose(y_bf16.T, y_ref, atol=1e-1, rtol=2e-2)

    print("KERNEL_OK")
</pallas_src>

<mosaic_0001>
module attributes {stable_mosaic.version = 11 : i64} {
  func.func @_linear_kernel(%arg0: i32, %arg1: memref<40x32xf32, #tpu.memory_space<vmem>>, %arg2: memref<32x1024xf32, #tpu.memory_space<vmem>>, %arg3: memref<40x1024xf32, #tpu.memory_space<vmem>>) attributes {dimension_semantics = [#tpu.dimension_semantics<parallel>], iteration_bounds = array<i64: 1>, scalar_prefetch = 0 : i64, scratch_operands = 0 : i64, tpu.core_type = #tpu.core_type<tc>, window_params = [{pipeline_mode = #tpu.pipeline_mode<synchronous>, transform_indices = @transform_0, window_bounds = array<i64: 40, 32>}, {transform_indices = @transform_1, window_bounds = array<i64: 32, 1024>}, {transform_indices = @transform_2, window_bounds = array<i64: 40, 1024>}]} {
    %c0 = arith.constant 0 : index
    %c0_0 = arith.constant 0 : index
    %0 = vector.load %arg1[%c0, %c0_0] : memref<40x32xf32, #tpu.memory_space<vmem>>, vector<40x32xf32>
    %c0_1 = arith.constant 0 : index
    %c0_2 = arith.constant 0 : index
    %1 = vector.load %arg2[%c0_1, %c0_2] : memref<32x1024xf32, #tpu.memory_space<vmem>>, vector<32x1024xf32>
    %cst = arith.constant dense<0.000000e+00> : vector<40x1024xf32>
    %2 = tpu.matmul %0, %1, %cst {dimension_numbers = #tpu.dot_dimension_numbers<[1], [0], [0], [1], [0, 0, 1, 1], [], []>} : vector<40x32xf32>, vector<32x1024xf32>, vector<40x1024xf32> -> vector<40x1024xf32>
    %c0_3 = arith.constant 0 : index
    %c0_4 = arith.constant 0 : index
    %3 = vector.load %arg3[%c0_3, %c0_4] : memref<40x1024xf32, #tpu.memory_space<vmem>>, vector<40x1024xf32>
    tpu.vector_store %arg3[%c0_3, %c0_4], %2 {strides = array<i32>} : memref<40x1024xf32, #tpu.memory_space<vmem>>, vector<40x1024xf32>,
    return
  }
  func.func @transform_0(%arg0: i32) -> (i32, i32) {
    %c0_i32 = arith.constant 0 : i32
    %c0_i32_0 = arith.constant 0 : i32
    %c0_i32_1 = arith.constant 0 : i32
    return %c0_i32, %c0_i32_0 : i32, i32
  }
  func.func @transform_1(%arg0: i32) -> (i32, i32) {
    %c0_i32 = arith.constant 0 : i32
    %c0_i32_0 = arith.constant 0 : i32
    return %c0_i32, %arg0 : i32, i32
  }
  func.func @transform_2(%arg0: i32) -> (i32, i32) {
    %c0_i32 = arith.constant 0 : i32
    %c0_i32_0 = arith.constant 0 : i32
    return %c0_i32, %arg0 : i32, i32
  }
}

</mosaic_0001>

<llo_original>
// kernel: irreps_linear_pallas_cm.1
$region0: #{irreps_linear_pallas_cm.1}
  #allocation0 [shape = 'u32[]', space=smem, size = 0x4, offset = 0x4, fixed_abs, tag = 'smem constant byte address 0x4 - core index']
  #allocation1 [shape = 'u32[72,128]{1,0:T(1,128)}', space=vmem, size = 0x9000, scoped, tag = 'internal scratch']
  %s0 = inlined_call_operand.vmem [shape: f32[40,32], index: 0, kind: input, shape index: {}]
  %s1 = inlined_call_operand.hbm [shape: f32[32,1000], index: 1, kind: input, shape index: {}]
  %s2 = inlined_call_operand.hbm [shape: f32[40,1000], index: 2, kind: output, shape index: {}]
  %s3 = sld [smem:[#allocation0]]
  $region22: #{irreps_linear_pallas_cm.1} parent=0
    _
  %s5 = ssub.s32 1, %s3
  %s6 = scalar_select 0, %s5, %s3
  $region1: #{irreps_linear_pallas_cm.1} parent=0
    #allocation2 [shape = 'u8[131072]{0}', space=vmem, size = 0x20000, scoped, tag = 'input window, operand 1, single buffered']
    #allocation3 [shape = 's32[1]{0}', space=sflag, size = 0x4, scoped, tag = 'scoped memory for irreps_linear_pallas_cm.1']
    #allocation4 [shape = 's32[1]{0}', space=sflag, size = 0x4, scoped, tag = 'scoped memory for irreps_linear_pallas_cm.1']
    #allocation5 [shape = 'u8[163840]{0}', space=vmem, size = 0x28000, scoped, tag = 'output window, operand 0, single buffered']
    %7 = vsyncpa [#allocation3], 0
    %8 = vsyncpa [#allocation4], 0
    // Predicated region
    $region2: #{irreps_linear_pallas_cm.1} parent=1 // pred_check
      _
    $region3: #{irreps_linear_pallas_cm.1} parent=1 // pred_check_branch
      %10 = sbr.rel (0) target = $region5
    $region4: #{irreps_linear_pallas_cm.1} parent=1 // pred_region
      _
    $region5: #{irreps_linear_pallas_cm.1} parent=1 // pred_fallthru
      _
    // Predicated region
    $region6: #{irreps_linear_pallas_cm.1} parent=1 // pred_check
      _
    $region7: #{irreps_linear_pallas_cm.1} parent=1 // pred_check_branch
      %12 = sbr.rel (0) target = $region9
    $region8: #{irreps_linear_pallas_cm.1} parent=1 // pred_region
      %14 = vsyncadd [#allocation3], 0
      %s15 = sshll.u32 %s1, 4
      %s16 = int_to_ptr.hbm [resolvable:$true] %s15
      %s17 = sshll.u32 [#allocation2], 4
      %s18 = int_to_ptr.vmem [resolvable:$true] %s17
      %23 = dma.hbm_to_vmem [thread:$0]  %s16, 4096, %s18, [#allocation3], 1024, 1024, 64
    $region9: #{irreps_linear_pallas_cm.1} parent=1 // pred_fallthru
      _
    // Predicated region
    $region10: #{irreps_linear_pallas_cm.1} parent=1 // pred_check
      _
    $region11: #{irreps_linear_pallas_cm.1} parent=1 // pred_check_branch
      %25 = sbr.rel (0) target = $region13
    $region12: #{irreps_linear_pallas_cm.1} parent=1 // pred_region
      %27 = dma.done [#allocation3], 4096
    $region13: #{irreps_linear_pallas_cm.1} parent=1 // pred_fallthru
      _
    %v28 = vld [vmem:[%s0] sm:$0xff]
    %v29 = vld [vmem:[%s0 + $0x8] sm:$0xff]
    %v30 = vld [vmem:[%s0 + $0x10] sm:$0xff]
    %v31 = vld [vmem:[%s0 + $0x18] sm:$0xff]
    %v32 = vld [vmem:[%s0 + $0x20] sm:$0xff]
    %v33 = vld [vmem:[#allocation2] sm:$0xff]
    %v34 = vld [vmem:[#allocation2 + $0x8] sm:$0xff]
    %v35 = vld [vmem:[#allocation2 + $0x10] sm:$0xff]
    %v36 = vld [vmem:[#allocation2 + $0x18] sm:$0xff]
    %v37 = vld [vmem:[#allocation2 + $0x20] sm:$0xff]
    %v38 = vld [vmem:[#allocation2 + $0x28] sm:$0xff]
    %v39 = vld [vmem:[#allocation2 + $0x30] sm:$0xff]
    %v40 = vld [vmem:[#allocation2 + $0x38] sm:$0xff]
    %v41 = vld [vmem:[#allocation2 + $0x40] sm:$0xff]
    %v42 = vld [vmem:[#allocation2 + $0x48] sm:$0xff]
    %v43 = vld [vmem:[#allocation2 + $0x50] sm:$0xff]
    %v44 = vld [vmem:[#allocation2 + $0x58] sm:$0xff]
    %v45 = vld [vmem:[#allocation2 + $0x60] sm:$0xff]
    %v46 = vld [vmem:[#allocation2 + $0x68] sm:$0xff]
    %v47 = vld [vmem:[#allocation2 + $0x70] sm:$0xff]
    %v48 = vld [vmem:[#allocation2 + $0x78] sm:$0xff]
    %v49 = vld [vmem:[#allocation2 + $0x80] sm:$0xff]
    %v50 = vld [vmem:[#allocation2 + $0x88] sm:$0xff]
    %v51 = vld [vmem:[#allocation2 + $0x90] sm:$0xff]
    %v52 = vld [vmem:[#allocation2 + $0x98] sm:$0xff]
    %v53 = vld [vmem:[#allocation2 + $0xa0] sm:$0xff]
    %v54 = vld [vmem:[#allocation2 + $0xa8] sm:$0xff]
    %v55 = vld [vmem:[#allocation2 + $0xb0] sm:$0xff]
    %v56 = vld [vmem:[#allocation2 + $0xb8] sm:$0xff]
    %v57 = vld [vmem:[#allocation2 + $0xc0] sm:$0xff]
    %v58 = vld [vmem:[#allocation2 + $0xc8] sm:$0xff]
    %v59 = vld [vmem:[#allocation2 + $0xd0] sm:$0xff]
    %v60 = vld [vmem:[#allocation2 + $0xd8] sm:$0xff]
    %v61 = vld [vmem:[#allocation2 + $0xe0] sm:$0xff]
    %v62 = vld [vmem:[#allocation2 + $0xe8] sm:$0xff]
    %v63 = vld [vmem:[#allocation2 + $0xf0] sm:$0xff]
    %v64 = vld [vmem:[#allocation2 + $0xf8] sm:$0xff]
    %vm65 = vcmask 261120
    %v67 = vsel %vm65, %v28, 0
    %v70 = vsel %vm65, %v29, 0
    %v73 = vsel %vm65, %v30, 0
    %v76 = vsel %vm65, %v31, 0
    %v79 = vsel %vm65, %v32, 0
    %81 = vmatpush.msra.mxu0 0.0
    %82 = vmatpush.msra.mxu0 0.0
    %83 = vmatpush.msra.mxu0 0.0
    %84 = vmatpush.msra.mxu0 0.0
    %85 = vmatpush.msra.mxu0 0.0
    %86 = vmatpush.msra.mxu0 0.0
    %87 = vmatpush.msra.mxu0 0.0
    %88 = vmatpush.msra.mxu0 0.0
    %89 = vmatpush.msra.mxu0 0.0
    %90 = vmatpush.msra.mxu0 0.0
    %91 = vmatpush.msra.mxu0 0.0
    %92 = vmatpush.msra.mxu0 0.0
    %93 = vmatpush.msra.mxu0 %v57
    %94 = vmatpush.msra.mxu0 %v49
    %95 = vmatpush.msra.mxu0 %v41
    %96 = vmatpush.msra.mxu0 %v33
    %97 = vmatmul.f32.gmra.mxu0 %v67
    %v98 = vpop.f32.mrf.mxu0
    %v99 = vadd.f32 0.0, %v98
    %100 = vmatmul.f32.gmra.mxu0 %v70
    %v101 = vpop.f32.mrf.mxu0
    %v102 = vadd.f32 0.0, %v101
    %103 = vmatmul.f32.gmra.mxu0 %v73
    %v104 = vpop.f32.mrf.mxu0
    %v105 = vadd.f32 0.0, %v104
    %106 = vmatmul.f32.gmra.mxu0 %v76
    %v107 = vpop.f32.mrf.mxu0
    %v108 = vadd.f32 0.0, %v107
    %109 = vmatmul.f32.gmra.mxu0 %v79
    %v110 = vpop.f32.mrf.mxu0
    %v111 = vadd.f32 0.0, %v110
    %112 = vdwg.mxu0
    %113 = vmatpush.msra.mxu0 0.0
    %114 = vmatpush.msra.mxu0 0.0
    %115 = vmatpush.msra.mxu0 0.0
    %116 = vmatpush.msra.mxu0 0.0
    %117 = vmatpush.msra.mxu0 0.0
    %118 = vmatpush.msra.mxu0 0.0
    %119 = vmatpush.msra.mxu0 0.0
    %120 = vmatpush.msra.mxu0 0.0
    %121 = vmatpush.msra.mxu0 0.0
    %122 = vmatpush.msra.mxu0 0.0
    %123 = vmatpush.msra.mxu0 0.0
    %124 = vmatpush.msra.mxu0 0.0
    %125 = vmatpush.msra.mxu0 %v58
    %126 = vmatpush.msra.mxu0 %v50
    %127 = vmatpush.msra.mxu0 %v42
    %128 = vmatpush.msra.mxu0 %v34
    %129 = vmatmul.f32.gmra.mxu0 %v67
    %v130 = vpop.f32.mrf.mxu0
    %v131 = vadd.f32 0.0, %v130
    %132 = vmatmul.f32.gmra.mxu0 %v70
    %v133 = vpop.f32.mrf.mxu0
    %v134 = vadd.f32 0.0, %v133
    %135 = vmatmul.f32.gmra.mxu0 %v73
    %v136 = vpop.f32.mrf.mxu0
    %v137 = vadd.f32 0.0, %v136
    %138 = vmatmul.f32.gmra.mxu0 %v76
    %v139 = vpop.f32.mrf.mxu0
    %v140 = vadd.f32 0.0, %v139
    %141 = vmatmul.f32.gmra.mxu0 %v79
    %v142 = vpop.f32.mrf.mxu0
    %v143 = vadd.f32 0.0, %v142
    %144 = vdwg.mxu0
    %145 = vmatpush.msra.mxu0 0.0
    %146 = vmatpush.msra.mxu0 0.0
    %147 = vmatpush.msra.mxu0 0.0
    %148 = vmatpush.msra.mxu0 0.0
    %149 = vmatpush.msra.mxu0 0.0
    %150 = vmatpush.msra.mxu0 0.0
    %151 = vmatpush.msra.mxu0 0.0
    %152 = vmatpush.msra.mxu0 0.0
    %153 = vmatpush.msra.mxu0 0.0
    %154 = vmatpush.msra.mxu0 0.0
    %155 = vmatpush.msra.mxu0 0.0
    %156 = vmatpush.msra.mxu0 0.0
    %157 = vmatpush.msra.mxu0 %v59
    %158 = vmatpush.msra.mxu0 %v51
    %159 = vmatpush.msra.mxu0 %v43
    %160 = vmatpush.msra.mxu0 %v35
    %161 = vmatmul.f32.gmra.mxu0 %v67
    %v162 = vpop.f32.mrf.mxu0
    %v163 = vadd.f32 0.0, %v162
    %164 = vmatmul.f32.gmra.mxu0 %v70
    %v165 = vpop.f32.mrf.mxu0
    %v166 = vadd.f32 0.0, %v165
    %167 = vmatmul.f32.gmra.mxu0 %v73
    %v168 = vpop.f32.mrf.mxu0
    %v169 = vadd.f32 0.0, %v168
    %170 = vmatmul.f32.gmra.mxu0 %v76
    %v171 = vpop.f32.mrf.mxu0
    %v172 = vadd.f32 0.0, %v171
    %173 = vmatmul.f32.gmra.mxu0 %v79
    %v174 = vpop.f32.mrf.mxu0
    %v175 = vadd.f32 0.0, %v174
    %176 = vdwg.mxu0
    %177 = vmatpush.msra.mxu0 0.0
    %178 = vmatpush.msra.mxu0 0.0
    %179 = vmatpush.msra.mxu0 0.0
    %180 = vmatpush.msra.mxu0 0.0
    %181 = vmatpush.msra.mxu0 0.0
    %182 = vmatpush.msra.mxu0 0.0
    %183 = vmatpush.msra.mxu0 0.0
    %184 = vmatpush.msra.mxu0 0.0
    %185 = vmatpush.msra.mxu0 0.0
    %186 = vmatpush.msra.mxu0 0.0
    %187 = vmatpush.msra.mxu0 0.0
    %188 = vmatpush.msra.mxu0 0.0
    %189 = vmatpush.msra.mxu0 %v60
    %190 = vmatpush.msra.mxu0 %v52
    %191 = vmatpush.msra.mxu0 %v44
    %192 = vmatpush.msra.mxu0 %v36
    %193 = vmatmul.f32.gmra.mxu0 %v67
    %v194 = vpop.f32.mrf.mxu0
    %v195 = vadd.f32 0.0, %v194
    %196 = vmatmul.f32.gmra.mxu0 %v70
    %v197 = vpop.f32.mrf.mxu0
    %v198 = vadd.f32 0.0, %v197
    %199 = vmatmul.f32.gmra.mxu0 %v73
    %v200 = vpop.f32.mrf.mxu0
    %v201 = vadd.f32 0.0, %v200
    %202 = vmatmul.f32.gmra.mxu0 %v76
    %v203 = vpop.f32.mrf.mxu0
    %v204 = vadd.f32 0.0, %v203
    %205 = vmatmul.f32.gmra.mxu0 %v79
    %v206 = vpop.f32.mrf.mxu0
    %v207 = vadd.f32 0.0, %v206
    %208 = vdwg.mxu0
    %209 = vmatpush.msra.mxu0 0.0
    %210 = vmatpush.msra.mxu0 0.0
    %211 = vmatpush.msra.mxu0 0.0
    %212 = vmatpush.msra.mxu0 0.0
    %213 = vmatpush.msra.mxu0 0.0
    %214 = vmatpush.msra.mxu0 0.0
    %215 = vmatpush.msra.mxu0 0.0
    %216 = vmatpush.msra.mxu0 0.0
    %217 = vmatpush.msra.mxu0 0.0
    %218 = vmatpush.msra.mxu0 0.0
    %219 = vmatpush.msra.mxu0 0.0
    %220 = vmatpush.msra.mxu0 0.0
    %221 = vmatpush.msra.mxu0 %v61
    %222 = vmatpush.msra.mxu0 %v53
    %223 = vmatpush.msra.mxu0 %v45
    %224 = vmatpush.msra.mxu0 %v37
    %225 = vmatmul.f32.gmra.mxu0 %v67
    %v226 = vpop.f32.mrf.mxu0
    %v227 = vadd.f32 0.0, %v226
    %228 = vmatmul.f32.gmra.mxu0 %v70
    %v229 = vpop.f32.mrf.mxu0
    %v230 = vadd.f32 0.0, %v229
    %231 = vmatmul.f32.gmra.mxu0 %v73
    %v232 = vpop.f32.mrf.mxu0
    %v233 = vadd.f32 0.0, %v232
    %234 = vmatmul.f32.gmra.mxu0 %v76
    %v235 = vpop.f32.mrf.mxu0
    %v236 = vadd.f32 0.0, %v235
    %237 = vmatmul.f32.gmra.mxu0 %v79
    %v238 = vpop.f32.mrf.mxu0
    %v239 = vadd.f32 0.0, %v238
    %240 = vdwg.mxu0
    %241 = vmatpush.msra.mxu0 0.0
    %242 = vmatpush.msra.mxu0 0.0
    %243 = vmatpush.msra.mxu0 0.0
    %244 = vmatpush.msra.mxu0 0.0
    %245 = vmatpush.msra.mxu0 0.0
    %246 = vmatpush.msra.mxu0 0.0
    %247 = vmatpush.msra.mxu0 0.0
    %248 = vmatpush.msra.mxu0 0.0
    %249 = vmatpush.msra.mxu0 0.0
    %250 = vmatpush.msra.mxu0 0.0
    %251 = vmatpush.msra.mxu0 0.0
    %252 = vmatpush.msra.mxu0 0.0
    %253 = vmatpush.msra.mxu0 %v62
    %254 = vmatpush.msra.mxu0 %v54
    %255 = vmatpush.msra.mxu0 %v46
    %256 = vmatpush.msra.mxu0 %v38
    %257 = vmatmul.f32.gmra.mxu0 %v67
    %v258 = vpop.f32.mrf.mxu0
    %v259 = vadd.f32 0.0, %v258
    %260 = vmatmul.f32.gmra.mxu0 %v70
    %v261 = vpop.f32.mrf.mxu0
    %v262 = vadd.f32 0.0, %v261
    %263 = vmatmul.f32.gmra.mxu0 %v73
    %v264 = vpop.f32.mrf.mxu0
    %v265 = vadd.f32 0.0, %v264
    %266 = vmatmul.f32.gmra.mxu0 %v76
    %v267 = vpop.f32.mrf.mxu0
    %v268 = vadd.f32 0.0, %v267
    %269 = vmatmul.f32.gmra.mxu0 %v79
    %v270 = vpop.f32.mrf.mxu0
    %v271 = vadd.f32 0.0, %v270
    %272 = vdwg.mxu0
    %273 = vmatpush.msra.mxu0 0.0
    %274 = vmatpush.msra.mxu0 0.0
    %275 = vmatpush.msra.mxu0 0.0
    %276 = vmatpush.msra.mxu0 0.0
    %277 = vmatpush.msra.mxu0 0.0
    %278 = vmatpush.msra.mxu0 0.0
    %279 = vmatpush.msra.mxu0 0.0
    %280 = vmatpush.msra.mxu0 0.0
    %281 = vmatpush.msra.mxu0 0.0
    %282 = vmatpush.msra.mxu0 0.0
    %283 = vmatpush.msra.mxu0 0.0
    %284 = vmatpush.msra.mxu0 0.0
    %285 = vmatpush.msra.mxu0 %v63
    %286 = vmatpush.msra.mxu0 %v55
    %287 = vmatpush.msra.mxu0 %v47
    %288 = vmatpush.msra.mxu0 %v39
    %289 = vmatmul.f32.gmra.mxu0 %v67
    %v290 = vpop.f32.mrf.mxu0
    %v291 = vadd.f32 0.0, %v290
    %292 = vmatmul.f32.gmra.mxu0 %v70
    %v293 = vpop.f32.mrf.mxu0
    %v294 = vadd.f32 0.0, %v293
    %295 = vmatmul.f32.gmra.mxu0 %v73
    %v296 = vpop.f32.mrf.mxu0
    %v297 = vadd.f32 0.0, %v296
    %298 = vmatmul.f32.gmra.mxu0 %v76
    %v299 = vpop.f32.mrf.mxu0
    %v300 = vadd.f32 0.0, %v299
    %301 = vmatmul.f32.gmra.mxu0 %v79
    %v302 = vpop.f32.mrf.mxu0
    %v303 = vadd.f32 0.0, %v302
    %304 = vdwg.mxu0
    %305 = vmatpush.msra.mxu0 0.0
    %306 = vmatpush.msra.mxu0 0.0
    %307 = vmatpush.msra.mxu0 0.0
    %308 = vmatpush.msra.mxu0 0.0
    %309 = vmatpush.msra.mxu0 0.0
    %310 = vmatpush.msra.mxu0 0.0
    %311 = vmatpush.msra.mxu0 0.0
    %312 = vmatpush.msra.mxu0 0.0
    %313 = vmatpush.msra.mxu0 0.0
    %314 = vmatpush.msra.mxu0 0.0
    %315 = vmatpush.msra.mxu0 0.0
    %316 = vmatpush.msra.mxu0 0.0
    %317 = vmatpush.msra.mxu0 %v64
    %318 = vmatpush.msra.mxu0 %v56
    %319 = vmatpush.msra.mxu0 %v48
    %320 = vmatpush.msra.mxu0 %v40
    %321 = vmatmul.f32.gmra.mxu0 %v67
    %v322 = vpop.f32.mrf.mxu0
    %v323 = vadd.f32 0.0, %v322
    %324 = vmatmul.f32.gmra.mxu0 %v70
    %v325 = vpop.f32.mrf.mxu0
    %v326 = vadd.f32 0.0, %v325
    %327 = vmatmul.f32.gmra.mxu0 %v73
    %v328 = vpop.f32.mrf.mxu0
    %v329 = vadd.f32 0.0, %v328
    %330 = vmatmul.f32.gmra.mxu0 %v76
    %v331 = vpop.f32.mrf.mxu0
    %v332 = vadd.f32 0.0, %v331
    %333 = vmatmul.f32.gmra.mxu0 %v79
    %v334 = vpop.f32.mrf.mxu0
    %v335 = vadd.f32 0.0, %v334
    %336 = vdwg.mxu0
    %337 = vst [vmem:[#allocation5] sm:$0xff] %v99
    %338 = vst [vmem:[#allocation5 + $0x8] sm:$0xff] %v131
    %339 = vst [vmem:[#allocation5 + $0x10] sm:$0xff] %v163
    %340 = vst [vmem:[#allocation5 + $0x18] sm:$0xff] %v195
    %341 = vst [vmem:[#allocation5 + $0x20] sm:$0xff] %v227
    %342 = vst [vmem:[#allocation5 + $0x28] sm:$0xff] %v259
    %343 = vst [vmem:[#allocation5 + $0x30] sm:$0xff] %v291
    %344 = vst [vmem:[#allocation5 + $0x38] sm:$0xff] %v323
    %345 = vst [vmem:[#allocation5 + $0x40] sm:$0xff] %v102
    %346 = vst [vmem:[#allocation5 + $0x48] sm:$0xff] %v134
    %347 = vst [vmem:[#allocation5 + $0x50] sm:$0xff] %v166
    %348 = vst [vmem:[#allocation5 + $0x58] sm:$0xff] %v198
    %349 = vst [vmem:[#allocation5 + $0x60] sm:$0xff] %v230
    %350 = vst [vmem:[#allocation5 + $0x68] sm:$0xff] %v262
    %351 = vst [vmem:[#allocation5 + $0x70] sm:$0xff] %v294
    %352 = vst [vmem:[#allocation5 + $0x78] sm:$0xff] %v326
    %353 = vst [vmem:[#allocation5 + $0x80] sm:$0xff] %v105
    %354 = vst [vmem:[#allocation5 + $0x88] sm:$0xff] %v137
    %355 = vst [vmem:[#allocation5 + $0x90] sm:$0xff] %v169
    %356 = vst [vmem:[#allocation5 + $0x98] sm:$0xff] %v201
    %357 = vst [vmem:[#allocation5 + $0xa0] sm:$0xff] %v233
    %358 = vst [vmem:[#allocation5 + $0xa8] sm:$0xff] %v265
    %359 = vst [vmem:[#allocation5 + $0xb0] sm:$0xff] %v297
    %360 = vst [vmem:[#allocation5 + $0xb8] sm:$0xff] %v329
    %361 = vst [vmem:[#allocation5 + $0xc0] sm:$0xff] %v108
    %362 = vst [vmem:[#allocation5 + $0xc8] sm:$0xff] %v140
    %363 = vst [vmem:[#allocation5 + $0xd0] sm:$0xff] %v172
    %364 = vst [vmem:[#allocation5 + $0xd8] sm:$0xff] %v204
    %365 = vst [vmem:[#allocation5 + $0xe0] sm:$0xff] %v236
    %366 = vst [vmem:[#allocation5 + $0xe8] sm:$0xff] %v268
    %367 = vst [vmem:[#allocation5 + $0xf0] sm:$0xff] %v300
    %368 = vst [vmem:[#allocation5 + $0xf8] sm:$0xff] %v332
    %369 = vst [vmem:[#allocation5 + $0x100] sm:$0xff] %v111
    %370 = vst [vmem:[#allocation5 + $0x108] sm:$0xff] %v143
    %371 = vst [vmem:[#allocation5 + $0x110] sm:$0xff] %v175
    %372 = vst [vmem:[#allocation5 + $0x118] sm:$0xff] %v207
    %373 = vst [vmem:[#allocation5 + $0x120] sm:$0xff] %v239
    %374 = vst [vmem:[#allocation5 + $0x128] sm:$0xff] %v271
    %375 = vst [vmem:[#allocation5 + $0x130] sm:$0xff] %v303
    %376 = vst [vmem:[#allocation5 + $0x138] sm:$0xff] %v335
    // Predicated region
    $region14: #{irreps_linear_pallas_cm.1} parent=1 // pred_check
      _
    $region15: #{irreps_linear_pallas_cm.1} parent=1 // pred_check_branch
      %378 = sbr.rel (0) target = $region17
    $region16: #{irreps_linear_pallas_cm.1} parent=1 // pred_region
      %380 = vsyncadd [#allocation4], 0
      %s381 = sshll.u32 [#allocation5], 4
      %s382 = int_to_ptr.vmem [resolvable:$true] %s381
      %s383 = sshll.u32 %s2, 4
      %s384 = int_to_ptr.hbm [resolvable:$true] %s383
      %389 = dma.vmem_to_hbm [thread:$0]  %s382, 5120, %s384, [#allocation4], 1024, 1024, 64
    $region17: #{irreps_linear_pallas_cm.1} parent=1 // pred_fallthru
      _
    // Predicated region
    $region18: #{irreps_linear_pallas_cm.1} parent=1 // pred_check
      _
    $region19: #{irreps_linear_pallas_cm.1} parent=1 // pred_check_branch
      %391 = sbr.rel (0) target = $region21
    $region20: #{irreps_linear_pallas_cm.1} parent=1 // pred_region
      %393 = dma.done [#allocation4], 5120
    $region21: #{irreps_linear_pallas_cm.1} parent=1 // pred_fallthru
      _
    %394 = vsyncpa [#allocation3], 1
    %395 = vsyncpa [#allocation4], 1

</llo_original>
